<compile_context>
chip_gen: v7x
topology: tpu7x:2x2x1
jax: 0.10.0
libtpu: 0.0.40
codegen_flags: <defaults>
</compile_context>

<pallas_src>
import jax
import jax.numpy as jnp
from jax.experimental import pallas as pl
from jax.experimental.pallas import tpu as pltpu


def _cls_head_kernel(x_ref, w1_ref, b1_ref, w2_ref, b2_ref, o_ref):
    # x_ref:  [tb, H]   CLS activations tile (input dtype, auto-pipelined)
    # w1_ref: [H, H]    bf16 dense weight (in, out), VMEM-resident
    # b1_ref: [1, H]    f32 dense bias
    # w2_ref: [H, Lp]   bf16 out_proj weight (in, out_padded), VMEM-resident
    # b2_ref: [1, Lp]   f32 out_proj bias (zero-padded)
    # o_ref:  [tb, Lp]  logits tile (padded)
    x = x_ref[...].astype(jnp.bfloat16)
    h = jnp.dot(x, w1_ref[...], preferred_element_type=jnp.float32)
    h = jnp.tanh(h + b1_ref[...])                       # f32 tanh on the EUP
    logits = jnp.dot(h.astype(jnp.bfloat16), w2_ref[...],
                     preferred_element_type=jnp.float32) + b2_ref[...]
    o_ref[...] = logits.astype(o_ref.dtype)


# Cap so the double-buffered f32 [tb, H] input tile stays well inside v7x's
# scoped VMEM even for large hidden sizes.
_TB_CAP = 512


def _pick_batch_tile(B):
    """Return (tb, B_padded). tb <= _TB_CAP; irregular large B gets padded."""
    if B <= _TB_CAP:
        return B, B
    for c in (512, 256, 128, 64, 32, 16, 8):
        if B % c == 0:
            return c, B
    tb = 256
    return tb, pl.cdiv(B, tb) * tb


def prepare_head_params(w_dense, b_dense, w_out, b_out):
    """One-time parameter prep (hoisted out of the forward path).

    Weights stored (in, out) — i.e. PyTorch nn.Linear weight transposed.
    Returns (w1_bf16, b1_f32, w2_bf16_padded, b2_f32_padded, num_labels).
    """
    H = w_dense.shape[0]
    L = w_out.shape[1]
    L_pad = pl.cdiv(L, 128) * 128                       # lane-dense output
    w1 = jnp.asarray(w_dense, dtype=jnp.bfloat16)
    b1 = jnp.asarray(b_dense, dtype=jnp.float32).reshape(1, H)
    w2 = jnp.pad(jnp.asarray(w_out, dtype=jnp.bfloat16),
                 ((0, 0), (0, L_pad - L)))
    b2 = jnp.pad(jnp.asarray(b_out, dtype=jnp.float32),
                 (0, L_pad - L)).reshape(1, L_pad)
    return w1, b1, w2, b2, L


def roberta_classification_head(features, prepared):
    """features: [B, S, H]. `prepared` from prepare_head_params. Returns [B, L]."""
    w1, b1, w2, b2, L = prepared
    B, S, H = features.shape
    L_pad = w2.shape[1]
    itemsize = features.dtype.itemsize

    # CLS gather in the wrapper: contiguous [B, H] slab, auto double-buffered.
    cls = features[:, 0, :]
    tb, B_pad = _pick_batch_tile(B)
    if B_pad != B:
        cls = jnp.pad(cls, ((0, B_pad - B), (0, 0)))
    nb = B_pad // tb

    # Explicit VMEM budget (weights x2 buffers even though their block index
    # is constant, plus double-buffered input/output tiles) + headroom.
    vmem_bytes = (2 * (H * H + H * L_pad) * 2
                  + 2 * (H + L_pad) * 4
                  + 2 * tb * H * itemsize
                  + 2 * tb * L_pad * itemsize)
    vmem_limit = int(min(max(vmem_bytes + (4 << 20), 16 << 20), 96 << 20))

    cost = pl.CostEstimate(
        flops=2 * B_pad * H * (H + L_pad),
        transcendentals=B_pad * H,
        bytes_accessed=(B_pad * H * itemsize
                        + (H * H + H * L_pad) * 2
                        + (H + L_pad) * 4
                        + B_pad * L_pad * itemsize),
    )

    out_padded = pl.pallas_call(
        _cls_head_kernel,
        out_shape=jax.ShapeDtypeStruct((B_pad, L_pad), features.dtype),
        grid_spec=pltpu.PrefetchScalarGridSpec(
            num_scalar_prefetch=0,
            grid=(nb,),
            in_specs=[
                pl.BlockSpec((tb, H), lambda i: (i, 0)),       # CLS activations
                pl.BlockSpec((H, H), lambda i: (0, 0)),        # W_dense (resident)
                pl.BlockSpec((1, H), lambda i: (0, 0)),        # b_dense
                pl.BlockSpec((H, L_pad), lambda i: (0, 0)),    # W_out (resident)
                pl.BlockSpec((1, L_pad), lambda i: (0, 0)),    # b_out
            ],
            out_specs=pl.BlockSpec((tb, L_pad), lambda i: (i, 0)),
        ),
        compiler_params=pltpu.CompilerParams(
            dimension_semantics=("parallel",),
            vmem_limit_bytes=vmem_limit),
        cost_estimate=cost,
    )(cls, w1, b1, w2, b2)

    return out_padded[:B, :L]


def _reference(features, w_dense, b_dense, w_out, b_out):
    x = features[:, 0, :]
    x = jnp.tanh(x @ w_dense + b_dense)
    return x @ w_out + b_out


if __name__ == "__main__":
    # Small config: batch=2, seq=8, hidden=32, num_labels=4
    B, S, H, L = 2, 8, 32, 4

    key = jax.random.PRNGKey(0)
    k_feat, k_w1, k_b1, k_w2, k_b2 = jax.random.split(key, 5)

    features = jax.random.normal(k_feat, (B, S, H), dtype=jnp.float32)

    # Deterministic synthetic parameters, stored (in, out); equivalent to
    # PyTorch nn.Linear weight (out, in) transposed.
    w_dense = jax.random.normal(k_w1, (H, H), dtype=jnp.float32) * 0.05
    b_dense = jax.random.normal(k_b1, (H,), dtype=jnp.float32) * 0.05
    w_out = jax.random.normal(k_w2, (H, L), dtype=jnp.float32) * 0.05
    b_out = jax.random.normal(k_b2, (L,), dtype=jnp.float32) * 0.05

    # One-time parameter prep (bf16 cast + label padding), then forward.
    prepared = prepare_head_params(w_dense, b_dense, w_out, b_out)
    logits = roberta_classification_head(features, prepared)
    logits = jax.block_until_ready(logits)

    ref = _reference(features, w_dense, b_dense, w_out, b_out)
    assert logits.shape == (B, L)
    # bf16 MXU operands -> relaxed tolerance vs the pure-f32 reference.
    assert jnp.allclose(logits, ref, atol=2e-2, rtol=2e-2), (logits, ref)

    print("KERNEL_OK")
</pallas_src>

<mosaic_0001>
module attributes {stable_mosaic.version = 11 : i64} {
  func.func @_cls_head_kernel(%arg0: i32, %arg1: memref<2x32xf32, #tpu.memory_space<vmem>>, %arg2: memref<32x32xbf16, #tpu.memory_space<vmem>>, %arg3: memref<1x32xf32, #tpu.memory_space<vmem>>, %arg4: memref<32x128xbf16, #tpu.memory_space<vmem>>, %arg5: memref<1x128xf32, #tpu.memory_space<vmem>>, %arg6: memref<2x128xf32, #tpu.memory_space<vmem>>) attributes {dimension_semantics = [#tpu.dimension_semantics<parallel>], iteration_bounds = array<i64: 1>, scalar_prefetch = 0 : i64, scratch_operands = 0 : i64, tpu.core_type = #tpu.core_type<tc>, window_params = [{transform_indices = @transform_0, window_bounds = array<i64: 2, 32>}, {pipeline_mode = #tpu.pipeline_mode<synchronous>, transform_indices = @transform_1, window_bounds = array<i64: 32, 32>}, {pipeline_mode = #tpu.pipeline_mode<synchronous>, transform_indices = @transform_2, window_bounds = array<i64: 1, 32>}, {pipeline_mode = #tpu.pipeline_mode<synchronous>, transform_indices = @transform_3, window_bounds = array<i64: 32, 128>}, {pipeline_mode = #tpu.pipeline_mode<synchronous>, transform_indices = @transform_4, window_bounds = array<i64: 1, 128>}, {transform_indices = @transform_5, window_bounds = array<i64: 2, 128>}]} {
    %c0 = arith.constant 0 : index
    %c0_0 = arith.constant 0 : index
    %0 = vector.load %arg1[%c0, %c0_0] : memref<2x32xf32, #tpu.memory_space<vmem>>, vector<2x32xf32>
    %1 = arith.truncf %0 : vector<2x32xf32> to vector<2x32xbf16>
    %c0_1 = arith.constant 0 : index
    %c0_2 = arith.constant 0 : index
    %2 = vector.load %arg2[%c0_1, %c0_2] : memref<32x32xbf16, #tpu.memory_space<vmem>>, vector<32x32xbf16>
    %cst = arith.constant dense<0.000000e+00> : vector<2x32xf32>
    %3 = tpu.matmul %1, %2, %cst {dimension_numbers = #tpu.dot_dimension_numbers<[1], [0], [0], [1], [0, 0, 1, 1], [], []>} : vector<2x32xbf16>, vector<32x32xbf16>, vector<2x32xf32> -> vector<2x32xf32>
    %c0_3 = arith.constant 0 : index
    %c0_4 = arith.constant 0 : index
    %4 = vector.load %arg3[%c0_3, %c0_4] : memref<1x32xf32, #tpu.memory_space<vmem>>, vector<1x32xf32>
    %5 = vector.broadcast %4 : vector<1x32xf32> to vector<2x32xf32>
    %6 = arith.addf %3, %5 : vector<2x32xf32>
    %7 = math.tanh %6 : vector<2x32xf32>
    %8 = arith.truncf %7 : vector<2x32xf32> to vector<2x32xbf16>
    %c0_5 = arith.constant 0 : index
    %c0_6 = arith.constant 0 : index
    %9 = vector.load %arg4[%c0_5, %c0_6] : memref<32x128xbf16, #tpu.memory_space<vmem>>, vector<32x128xbf16>
    %cst_7 = arith.constant dense<0.000000e+00> : vector<2x128xf32>
    %10 = tpu.matmul %8, %9, %cst_7 {dimension_numbers = #tpu.dot_dimension_numbers<[1], [0], [0], [1], [0, 0, 1, 1], [], []>} : vector<2x32xbf16>, vector<32x128xbf16>, vector<2x128xf32> -> vector<2x128xf32>
    %c0_8 = arith.constant 0 : index
    %c0_9 = arith.constant 0 : index
    %11 = vector.load %arg5[%c0_8, %c0_9] : memref<1x128xf32, #tpu.memory_space<vmem>>, vector<1x128xf32>
    %12 = vector.broadcast %11 : vector<1x128xf32> to vector<2x128xf32>
    %13 = arith.addf %10, %12 : vector<2x128xf32>
    %c0_10 = arith.constant 0 : index
    %c0_11 = arith.constant 0 : index
    %14 = vector.load %arg6[%c0_10, %c0_11] : memref<2x128xf32, #tpu.memory_space<vmem>>, vector<2x128xf32>
    tpu.vector_store %arg6[%c0_10, %c0_11], %13 {strides = array<i32>} : memref<2x128xf32, #tpu.memory_space<vmem>>, vector<2x128xf32>,
    return
  }
  func.func @transform_0(%arg0: i32) -> (i32, i32) {
    %c0_i32 = arith.constant 0 : i32
    %c0_i32_0 = arith.constant 0 : i32
    return %arg0, %c0_i32 : i32, i32
  }
  func.func @transform_1(%arg0: i32) -> (i32, i32) {
    %c0_i32 = arith.constant 0 : i32
    %c0_i32_0 = arith.constant 0 : i32
    %c0_i32_1 = arith.constant 0 : i32
    return %c0_i32, %c0_i32_0 : i32, i32
  }
  func.func @transform_2(%arg0: i32) -> (i32, i32) {
    %c0_i32 = arith.constant 0 : i32
    %c0_i32_0 = arith.constant 0 : i32
    %c0_i32_1 = arith.constant 0 : i32
    return %c0_i32, %c0_i32_0 : i32, i32
  }
  func.func @transform_3(%arg0: i32) -> (i32, i32) {
    %c0_i32 = arith.constant 0 : i32
    %c0_i32_0 = arith.constant 0 : i32
    %c0_i32_1 = arith.constant 0 : i32
    return %c0_i32, %c0_i32_0 : i32, i32
  }
  func.func @transform_4(%arg0: i32) -> (i32, i32) {
    %c0_i32 = arith.constant 0 : i32
    %c0_i32_0 = arith.constant 0 : i32
    %c0_i32_1 = arith.constant 0 : i32
    return %c0_i32, %c0_i32_0 : i32, i32
  }
  func.func @transform_5(%arg0: i32) -> (i32, i32) {
    %c0_i32 = arith.constant 0 : i32
    %c0_i32_0 = arith.constant 0 : i32
    return %arg0, %c0_i32 : i32, i32
  }
}

</mosaic_0001>

<llo_original>
// kernel: tpu_custom_call.1
$region0: #{tpu_custom_call.1}
  #allocation0 [shape = 'u32[]', space=smem, size = 0x4, offset = 0x4, fixed_abs, tag = 'smem constant byte address 0x4 - core index']
  #allocation1 [shape = 'u32[144,128]{1,0:T(1,128)}', space=vmem, size = 0x12000, scoped, tag = 'internal scratch']
  %s0 = inlined_call_operand.hbm [shape: f32[2,32], index: 0, kind: input, shape index: {}]
  %s1 = inlined_call_operand.hbm [shape: bf16[32,32], index: 1, kind: input, shape index: {}]
  %s2 = inlined_call_operand.vmem [shape: f32[1,32], index: 2, kind: input, shape index: {}]
  %s3 = inlined_call_operand.hbm [shape: bf16[32,128], index: 3, kind: input, shape index: {}]
  %s4 = inlined_call_operand.vmem [shape: f32[1,128], index: 4, kind: input, shape index: {}]
  %s5 = inlined_call_operand.hbm [shape: f32[2,128], index: 5, kind: output, shape index: {}]
  %s6 = sld [smem:[#allocation0]]
  $region42: #{tpu_custom_call.1} parent=0
    _
  %s8 = ssub.s32 1, %s6
  %s9 = scalar_select 0, %s8, %s6
  $region1: #{tpu_custom_call.1} parent=0
    #allocation2 [shape = 'u8[1024]{0}', space=vmem, size = 0x400, scoped, tag = 'input window, operand 0, single buffered']
    #allocation3 [shape = 's32[1]{0}', space=sflag, size = 0x4, scoped, tag = 'scoped memory for tpu_custom_call.1']
    #allocation4 [shape = 's32[1]{0}', space=sflag, size = 0x4, scoped, tag = 'scoped memory for tpu_custom_call.1']
    #allocation5 [shape = 'u8[8192]{0}', space=vmem, size = 0x2000, scoped, tag = 'input window, operand 1, single buffered']
    #allocation6 [shape = 's32[1]{0}', space=sflag, size = 0x4, scoped, tag = 'scoped memory for tpu_custom_call.1']
    #allocation7 [shape = 'u8[8192]{0}', space=vmem, size = 0x2000, scoped, tag = 'input window, operand 3, single buffered']
    #allocation8 [shape = 'u8[1024]{0}', space=vmem, size = 0x400, scoped, tag = 'output window, operand 0, single buffered']
    %10 = vsyncpa [#allocation3], 0
    %11 = vsyncpa [#allocation6], 0
    %12 = vsyncpa [#allocation4], 0
    // Predicated region
    $region2: #{tpu_custom_call.1} parent=1 // pred_check
      _
    $region3: #{tpu_custom_call.1} parent=1 // pred_check_branch
      %14 = sbr.rel (0) target = $region5
    $region4: #{tpu_custom_call.1} parent=1 // pred_region
      %s16 = ssub.s32 32, 32
      %17 = vsyncadd [#allocation3], %s16
      %s19 = sshll.u32 [#allocation2], 4
      %s20 = int_to_ptr.vmem [resolvable:$true] %s19
      %22 = dma.hbm_to_vmem [thread:$0]  %s0, 32, %s20, [#allocation3]
    $region5: #{tpu_custom_call.1} parent=1 // pred_fallthru
      _
    // Predicated region
    $region6: #{tpu_custom_call.1} parent=1 // pred_check
      _
    $region7: #{tpu_custom_call.1} parent=1 // pred_check_branch
      %24 = sbr.rel (0) target = $region9
    $region8: #{tpu_custom_call.1} parent=1 // pred_region
      %s26 = ssub.s32 256, 256
      %27 = vsyncadd [#allocation6], %s26
      %s28 = sshll.u32 [#allocation5], 4
      %s29 = int_to_ptr.vmem [resolvable:$true] %s28
      %34 = dma.hbm_to_vmem [thread:$0]  %s1, 256, %s29, [#allocation6], 64, 64, 4
    $region9: #{tpu_custom_call.1} parent=1 // pred_fallthru
      _
    // Predicated region
    $region10: #{tpu_custom_call.1} parent=1 // pred_check
      _
    $region11: #{tpu_custom_call.1} parent=1 // pred_check_branch
      %36 = sbr.rel (0) target = $region13
    $region12: #{tpu_custom_call.1} parent=1 // pred_region
      _
    $region13: #{tpu_custom_call.1} parent=1 // pred_fallthru
      _
    // Predicated region
    $region14: #{tpu_custom_call.1} parent=1 // pred_check
      _
    $region15: #{tpu_custom_call.1} parent=1 // pred_check_branch
      %38 = sbr.rel (0) target = $region17
    $region16: #{tpu_custom_call.1} parent=1 // pred_region
      %s40 = ssub.s32 256, 256
      %41 = vsyncadd [#allocation6], %s40
      %s42 = sshll.u32 [#allocation7], 4
      %s43 = int_to_ptr.vmem [resolvable:$true] %s42
      %48 = dma.hbm_to_vmem [thread:$0]  %s3, 256, %s43, [#allocation6], 64, 64, 4
    $region17: #{tpu_custom_call.1} parent=1 // pred_fallthru
      _
    // Predicated region
    $region18: #{tpu_custom_call.1} parent=1 // pred_check
      _
    $region19: #{tpu_custom_call.1} parent=1 // pred_check_branch
      %50 = sbr.rel (0) target = $region21
    $region20: #{tpu_custom_call.1} parent=1 // pred_region
      _
    $region21: #{tpu_custom_call.1} parent=1 // pred_fallthru
      _
    // Predicated region
    $region22: #{tpu_custom_call.1} parent=1 // pred_check
      _
    $region23: #{tpu_custom_call.1} parent=1 // pred_check_branch
      %52 = sbr.rel (0) target = $region25
    $region24: #{tpu_custom_call.1} parent=1 // pred_region
      %53 = dma.done [#allocation3], 32
    $region25: #{tpu_custom_call.1} parent=1 // pred_fallthru
      _
    // Predicated region
    $region26: #{tpu_custom_call.1} parent=1 // pred_check
      _
    $region27: #{tpu_custom_call.1} parent=1 // pred_check_branch
      %55 = sbr.rel (0) target = $region29
    $region28: #{tpu_custom_call.1} parent=1 // pred_region
      %56 = dma.done [#allocation6], 256
    $region29: #{tpu_custom_call.1} parent=1 // pred_fallthru
      _
    // Predicated region
    $region30: #{tpu_custom_call.1} parent=1 // pred_check
      _
    $region31: #{tpu_custom_call.1} parent=1 // pred_check_branch
      %58 = sbr.rel (0) target = $region33
    $region32: #{tpu_custom_call.1} parent=1 // pred_region
      %59 = dma.done [#allocation6], 256
    $region33: #{tpu_custom_call.1} parent=1 // pred_fallthru
      _
    %v61 = vld [vmem:[#allocation2] sm:$0x3]
    %v62 = vpack.c.bf16 %v61, %v61
    %v63 = vld [vmem:[#allocation5] sm:$0xf]
    %v64 = vld [vmem:[#allocation5 + $0x4] sm:$0xf]
    %v65 = vld [vmem:[#allocation5 + $0x8] sm:$0xf]
    %v66 = vld [vmem:[#allocation5 + $0xc] sm:$0xf]
    %v67 = vld [vmem:[%s2] sm:$0x1]
    %v69 = vlaneseq
    %v70 = vshrl.u32 %v69, 7
    %v71 = vsub.s32 0, %v70
    %v72 = vrot.slane %v67, %v71
    %v78 = vunpack.c.l.b16 %v63
    %v79 = vunpack.c.l.b16 %v64
    %v80 = vunpack.c.l.b16 %v65
    %v81 = vunpack.c.l.b16 %v66
    %v82 = vpack.c.b16 %v79, %v78
    %v83 = vpack.c.b16 %v81, %v80
    %vm86 = vcmask 261120
    %v88 = vsel %vm86, %v62, 0
    %90 = vmatprep.subr.bf16.mxu0 0
    %91 = vmatpush1.bf16.msra.mxu0 %v82
    %92 = vmatprep.subr.bf16.mxu0 0
    %93 = vmatpush1.bf16.msra.mxu0 %v83
    %94 = vmatprep.subr.bf16.mxu0 0
    %95 = vmatpush1.bf16.msra.mxu0 0
    %96 = vmatprep.subr.bf16.mxu0 0
    %97 = vmatpush1.bf16.msra.mxu0 0
    %98 = vmatprep.subr.bf16.mxu0 0
    %99 = vmatpush1.bf16.msra.mxu0 0
    %100 = vmatprep.subr.bf16.mxu0 0
    %101 = vmatpush1.bf16.msra.mxu0 0
    %102 = vmatprep.subr.bf16.mxu0 0
    %103 = vmatpush1.bf16.msra.mxu0 0
    %104 = vmatprep.subr.bf16.mxu0 0
    %105 = vmatpush1.bf16.msra.mxu0 0
    %106 = vmatprep.subr.bf16.mxu0 0
    %107 = vmatpush1.bf16.msra.mxu0 0
    %108 = vmatprep.subr.bf16.mxu0 0
    %109 = vmatpush1.bf16.msra.mxu0 0
    %110 = vmatprep.subr.bf16.mxu0 0
    %111 = vmatpush1.bf16.msra.mxu0 0
    %112 = vmatprep.subr.bf16.mxu0 0
    %113 = vmatpush1.bf16.msra.mxu0 0
    %114 = vmatprep.subr.bf16.mxu0 0
    %115 = vmatpush1.bf16.msra.mxu0 0
    %116 = vmatprep.subr.bf16.mxu0 0
    %117 = vmatpush1.bf16.msra.mxu0 0
    %118 = vmatprep.subr.bf16.mxu0 0
    %119 = vmatpush1.bf16.msra.mxu0 0
    %120 = vmatprep.subr.bf16.mxu0 0
    %121 = vmatpush1.bf16.msra.mxu0 0
    %122 = vmatprep.mubr.bf16.mxu0 0
    %123 = vmatmul.mubr.bf16.gmra.mrb[0].mxu0 %v88
    %v124 = vpop.f32.mrb[0].mxu0
    %v125 = vadd.f32 %v72, %v124
    %v126 = vpop.f32.mrb[0].mxu0
    %v127 = vpop.f32.mrb[0].mxu0
    %v128 = vpop.f32.mrb[0].mxu0
    %129 = vdwg.mxu0
    %v130 = vtanh.pop %v125
    %v131 = vpack.c.bf16 %v130, %v130
    %v132 = vld [vmem:[#allocation7] sm:$0xf]
    %v133 = vld [vmem:[#allocation7 + $0x4] sm:$0xf]
    %v134 = vld [vmem:[#allocation7 + $0x8] sm:$0xf]
    %v135 = vld [vmem:[#allocation7 + $0xc] sm:$0xf]
    %v136 = vld [vmem:[%s4] sm:$0x1]
    %v138 = vlaneseq
    %v139 = vshrl.u32 %v138, 7
    %v140 = vsub.s32 0, %v139
    %v141 = vrot.slane %v136, %v140
    %v147 = vunpack.c.l.b16 %v132
    %v148 = vunpack.c.l.b16 %v133
    %v149 = vunpack.c.l.b16 %v134
    %v150 = vunpack.c.l.b16 %v135
    %v151 = vpack.c.b16 %v148, %v147
    %v152 = vpack.c.b16 %v150, %v149
    %v156 = vsel %vm86, %v131, 0
    %158 = vmatprep.subr.bf16.mxu0 0
    %159 = vmatpush1.bf16.msra.mxu0 %v151
    %160 = vmatprep.subr.bf16.mxu0 0
    %161 = vmatpush1.bf16.msra.mxu0 %v152
    %162 = vmatprep.subr.bf16.mxu0 0
    %163 = vmatpush1.bf16.msra.mxu0 0
    %164 = vmatprep.subr.bf16.mxu0 0
    %165 = vmatpush1.bf16.msra.mxu0 0
    %166 = vmatprep.subr.bf16.mxu0 0
    %167 = vmatpush1.bf16.msra.mxu0 0
    %168 = vmatprep.subr.bf16.mxu0 0
    %169 = vmatpush1.bf16.msra.mxu0 0
    %170 = vmatprep.subr.bf16.mxu0 0
    %171 = vmatpush1.bf16.msra.mxu0 0
    %172 = vmatprep.subr.bf16.mxu0 0
    %173 = vmatpush1.bf16.msra.mxu0 0
    %174 = vmatprep.subr.bf16.mxu0 0
    %175 = vmatpush1.bf16.msra.mxu0 0
    %176 = vmatprep.subr.bf16.mxu0 0
    %177 = vmatpush1.bf16.msra.mxu0 0
    %178 = vmatprep.subr.bf16.mxu0 0
    %179 = vmatpush1.bf16.msra.mxu0 0
    %180 = vmatprep.subr.bf16.mxu0 0
    %181 = vmatpush1.bf16.msra.mxu0 0
    %182 = vmatprep.subr.bf16.mxu0 0
    %183 = vmatpush1.bf16.msra.mxu0 0
    %184 = vmatprep.subr.bf16.mxu0 0
    %185 = vmatpush1.bf16.msra.mxu0 0
    %186 = vmatprep.subr.bf16.mxu0 0
    %187 = vmatpush1.bf16.msra.mxu0 0
    %188 = vmatprep.subr.bf16.mxu0 0
    %189 = vmatpush1.bf16.msra.mxu0 0
    %190 = vmatprep.mubr.bf16.mxu0 0
    %191 = vmatmul.mubr.bf16.gmra.mrb[0].mxu0 %v156
    %v192 = vpop.f32.mrb[0].mxu0
    %v193 = vadd.f32 %v141, %v192
    %v194 = vpop.f32.mrb[0].mxu0
    %v195 = vpop.f32.mrb[0].mxu0
    %v196 = vpop.f32.mrb[0].mxu0
    %197 = vdwg.mxu0
    %198 = vst [vmem:[#allocation8] sm:$0x3] %v193
    // Predicated region
    $region34: #{tpu_custom_call.1} parent=1 // pred_check
      _
    $region35: #{tpu_custom_call.1} parent=1 // pred_check_branch
      %200 = sbr.rel (0) target = $region37
    $region36: #{tpu_custom_call.1} parent=1 // pred_region
      %s202 = ssub.s32 32, 32
      %203 = vsyncadd [#allocation4], %s202
      %s205 = sshll.u32 [#allocation8], 4
      %s206 = int_to_ptr.vmem [resolvable:$true] %s205
      %208 = dma.vmem_to_hbm [thread:$0]  %s206, 32, %s5, [#allocation4]
    $region37: #{tpu_custom_call.1} parent=1 // pred_fallthru
      _
    // Predicated region
    $region38: #{tpu_custom_call.1} parent=1 // pred_check
      _
    $region39: #{tpu_custom_call.1} parent=1 // pred_check_branch
      %210 = sbr.rel (0) target = $region41
    $region40: #{tpu_custom_call.1} parent=1 // pred_region
      %211 = dma.done [#allocation4], 32
    $region41: #{tpu_custom_call.1} parent=1 // pred_fallthru
      _
    %212 = vsyncpa [#allocation3], 1
    %213 = vsyncpa [#allocation6], 1
    %214 = vsyncpa [#allocation4], 1

</llo_original>
